<compile_context>
chip_gen: v7x
topology: tpu7x:2x2x1
jax: 0.10.0
libtpu: 0.0.40
codegen_flags: <defaults>
</compile_context>

<pallas_src>
import functools

import jax
import jax.numpy as jnp
from jax.experimental import pallas as pl
from jax.experimental.pallas import tpu as pltpu


def _round_up(x, m):
    return ((x + m - 1) // m) * m


def _pad2d(x, rows, cols):
    return jnp.pad(x, ((0, rows - x.shape[0]), (0, cols - x.shape[1])))


def _sage_conv_kernel(a_ref, xsrc_ref, w_ref, b_ref, *rest,
                      tile_dst, apply_relu, has_dropout):
    if has_dropout:
        drop_ref, o_ref = rest
    else:
        drop_ref = None
        (o_ref,) = rest

    i = pl.program_id(0)
    row0 = pl.multiple_of(i * tile_dst, tile_dst)

    # dst features are the first rows of the resident src-feature block (MFG convention)
    x_dst = xsrc_ref[pl.ds(row0, tile_dst), :]                       # (tile_dst, f_in_p) bf16

    # neighbor mean aggregation: (tile_dst, n_src_p) @ (n_src_p, f_in_p) -> f32 accum
    agg = jnp.dot(a_ref[...], xsrc_ref[...],
                  preferred_element_type=jnp.float32)                # (tile_dst, f_in_p)

    # fused self + neighbor transform: one MXU op with K = 2 * f_in_p
    lhs = jnp.concatenate([x_dst, agg.astype(jnp.bfloat16)], axis=-1)
    h = jnp.dot(lhs, w_ref[...], preferred_element_type=jnp.float32) + b_ref[...]

    if apply_relu:
        h = jnp.maximum(h, 0.0)

    if has_dropout:
        # drop_ref holds keep/(1-p) in bf16 (inverted-dropout scale), 0 where dropped.
        h = h * drop_ref[...].astype(jnp.float32)

    o_ref[...] = h.astype(o_ref.dtype)


def sage_conv(a_norm, x_src, w_self, w_neigh, bias, *,
              apply_relu=False, drop_scale=None, out_dtype=jnp.float32,
              target_tile_dst=256):
    """One SAGEConv('mean') layer, optionally fused with ReLU and dropout masking.

    a_norm:     (n_dst, n_src) row-normalized dense adjacency (f32; normalized before bf16 cast)
    x_src:      (n_src, f_in) src-node features (dst nodes = first n_dst rows)
    w_self:     (f_in, f_out), w_neigh: (f_in, f_out), bias: (f_out,)
    drop_scale: optional (n_dst, f_out) pre-scaled dropout mask (keep / (1 - p)), else None
    """
    n_dst, n_src = a_norm.shape
    f_in = x_src.shape[1]
    f_out = w_self.shape[1]
    assert w_self.shape == (f_in, f_out) and w_neigh.shape == (f_in, f_out)
    assert x_src.shape[0] == n_src and n_dst <= n_src

    # ---- TPU-friendly padded sizes -------------------------------------------------
    f_in_p = _round_up(f_in, 128)                     # lane-dense K
    f_out_p = _round_up(f_out, 128)                   # lane-dense output (unmasked vst)
    tile_dst = min(target_tile_dst, _round_up(n_dst, 8))
    n_dst_p = _round_up(n_dst, tile_dst)
    n_src_p = max(_round_up(n_src, 128), n_dst_p)     # >= n_dst_p so in-kernel dst slice is valid
    grid = (n_dst_p // tile_dst,)

    # ---- pad + cast operands (bf16 on the MXU path, f32 accumulation in-kernel) -----
    a_p = _pad2d(a_norm.astype(jnp.float32), n_dst_p, n_src_p).astype(jnp.bfloat16)
    x_p = _pad2d(x_src.astype(jnp.float32), n_src_p, f_in_p).astype(jnp.bfloat16)
    w_stacked = jnp.concatenate(
        [_pad2d(w_self.astype(jnp.float32), f_in_p, f_out_p),
         _pad2d(w_neigh.astype(jnp.float32), f_in_p, f_out_p)],
        axis=0).astype(jnp.bfloat16)                                  # (2*f_in_p, f_out_p)
    b_p = _pad2d(bias.reshape(1, f_out).astype(jnp.float32), 1, f_out_p)

    has_dropout = drop_scale is not None
    inputs = [a_p, x_p, w_stacked, b_p]
    in_specs = [
        pl.BlockSpec((tile_dst, n_src_p), lambda i: (i, 0)),   # A tile
        pl.BlockSpec((n_src_p, f_in_p), lambda i: (0, 0)),     # X_src (grid-invariant, resident)
        pl.BlockSpec((2 * f_in_p, f_out_p), lambda i: (0, 0)), # stacked weights (grid-invariant)
        pl.BlockSpec((1, f_out_p), lambda i: (0, 0)),          # bias (grid-invariant)
    ]
    if has_dropout:
        inputs.append(_pad2d(drop_scale.astype(jnp.float32), n_dst_p, f_out_p)
                      .astype(jnp.bfloat16))
        in_specs.append(pl.BlockSpec((tile_dst, f_out_p), lambda i: (i, 0)))

    kernel = functools.partial(
        _sage_conv_kernel,
        tile_dst=tile_dst, apply_relu=apply_relu, has_dropout=has_dropout)

    out_p = pl.pallas_call(
        kernel,
        out_shape=jax.ShapeDtypeStruct((n_dst_p, f_out_p), out_dtype),
        grid_spec=pltpu.PrefetchScalarGridSpec(
            num_scalar_prefetch=0,
            grid=grid,
            in_specs=in_specs,
            out_specs=pl.BlockSpec((tile_dst, f_out_p), lambda i: (i, 0)),
        ),
        compiler_params=pltpu.CompilerParams(
            dimension_semantics=("parallel",),          # dst tiles shard across TCs (v7x megacore)
            vmem_limit_bytes=64 * 1024 * 1024,          # above the 32 MiB default scoped limit
        ),
    )(*inputs)

    return out_p[:n_dst, :f_out]


def init_sage_params(key, in_size, hid_size, out_size):
    """Deterministic parameter init. NOTE: the reference module's layers are
    SAGEConv(in, hid) and SAGEConv(hid, hid); out_size is stored but unused in forward."""
    dims = [(in_size, hid_size), (hid_size, hid_size)]
    params = []
    for (fi, fo) in dims:
        key, k1, k2, k3 = jax.random.split(key, 4)
        params.append(dict(
            w_self=(jax.random.normal(k1, (fi, fo), jnp.float32) * 0.1),
            w_neigh=(jax.random.normal(k2, (fi, fo), jnp.float32) * 0.1),
            bias=(jax.random.normal(k3, (fo,), jnp.float32) * 0.01),
        ))
    return params


def sage_forward(params, blocks, x, *, training=True, key=None, drop_p=0.5):
    """Mirrors SAGE.forward(blocks, x): layer -> (ReLU -> Dropout) except last layer.

    `key` must be a fresh PRNG key per training step so dropout masks vary across steps.
    """
    if training and key is None:
        key = jax.random.PRNGKey(0)
    h = x
    n_layers = len(params)
    for l, (a_norm, p) in enumerate(zip(blocks, params)):
        last = (l == n_layers - 1)
        drop_scale = None
        if (not last) and training:
            key, sub = jax.random.split(key)
            n_dst = a_norm.shape[0]
            f_out = p["w_self"].shape[1]
            keep = jax.random.bernoulli(sub, 1.0 - drop_p, (n_dst, f_out))
            drop_scale = keep.astype(jnp.float32) * (1.0 / (1.0 - drop_p))
        h = sage_conv(
            a_norm, h, p["w_self"], p["w_neigh"], p["bias"],
            apply_relu=not last,
            drop_scale=drop_scale,
            # inter-layer activations in bf16 (halves HBM traffic), final output in f32
            out_dtype=jnp.float32 if last else jnp.bfloat16,
        )
    return h


def make_block(key, n_dst, n_src, p_edge=0.3):
    """Dense row-normalized adjacency standing in for a DGL MFG block with 'mean' agg.
    Zero-in-degree dst nodes get agg=0 via the deg clamp (DGL would require add_self_loop)."""
    adj = jax.random.bernoulli(key, p_edge, (n_dst, n_src)).astype(jnp.float32)
    deg = jnp.maximum(adj.sum(axis=-1, keepdims=True), 1.0)
    return adj / deg   # normalize in f32; bf16 cast happens after normalization, in sage_conv


if __name__ == "__main__":
    # small, module-consistent shapes
    in_size, hid_size, out_size = 16, 32, 32
    n_src0, n_dst0, n_dst1 = 64, 32, 16      # block0: 64 -> 32 nodes, block1: 32 -> 16 nodes

    root = jax.random.PRNGKey(0)
    k_feat, k_b0, k_b1, k_params, k_drop = jax.random.split(root, 5)

    x = jax.random.normal(k_feat, (n_src0, in_size), jnp.float32)
    blocks = [
        make_block(k_b0, n_dst0, n_src0),     # layer-0 block: src=64, dst=32
        make_block(k_b1, n_dst1, n_dst0),     # layer-1 block: src=32, dst=16
    ]
    params = init_sage_params(k_params, in_size, hid_size, out_size)

    out = sage_forward(params, blocks, x, training=True, key=k_drop)
    out = jax.block_until_ready(out)

    assert out.shape == (n_dst1, hid_size), out.shape
    assert out.dtype == jnp.float32
    print("KERNEL_OK")
</pallas_src>

<mosaic_0001>
module attributes {stable_mosaic.version = 11 : i64} {
  func.func @_sage_conv_kernel(%arg0: i32, %arg1: memref<32x128xbf16, #tpu.memory_space<vmem>>, %arg2: memref<128x128xbf16, #tpu.memory_space<vmem>>, %arg3: memref<256x128xbf16, #tpu.memory_space<vmem>>, %arg4: memref<1x128xf32, #tpu.memory_space<vmem>>, %arg5: memref<32x128xbf16, #tpu.memory_space<vmem>>, %arg6: memref<32x128xbf16, #tpu.memory_space<vmem>>) attributes {dimension_semantics = [#tpu.dimension_semantics<parallel>], iteration_bounds = array<i64: 1>, scalar_prefetch = 0 : i64, scratch_operands = 0 : i64, tpu.core_type = #tpu.core_type<tc>, window_params = [{transform_indices = @transform_0, window_bounds = array<i64: 32, 128>}, {pipeline_mode = #tpu.pipeline_mode<synchronous>, transform_indices = @transform_1, window_bounds = array<i64: 128, 128>}, {pipeline_mode = #tpu.pipeline_mode<synchronous>, transform_indices = @transform_2, window_bounds = array<i64: 256, 128>}, {pipeline_mode = #tpu.pipeline_mode<synchronous>, transform_indices = @transform_3, window_bounds = array<i64: 1, 128>}, {transform_indices = @transform_4, window_bounds = array<i64: 32, 128>}, {transform_indices = @transform_5, window_bounds = array<i64: 32, 128>}]} {
    %c32_i32 = arith.constant 32 : i32
    %0 = arith.muli %arg0, %c32_i32 : i32
    %1 = tpu.assume_multiple %0, 32 : i32
    %2 = arith.index_cast %1 : i32 to index
    %c0 = arith.constant 0 : index
    %3 = vector.load %arg2[%2, %c0] : memref<128x128xbf16, #tpu.memory_space<vmem>>, vector<32x128xbf16>
    %c0_0 = arith.constant 0 : index
    %c0_1 = arith.constant 0 : index
    %4 = vector.load %arg1[%c0_0, %c0_1] : memref<32x128xbf16, #tpu.memory_space<vmem>>, vector<32x128xbf16>
    %c0_2 = arith.constant 0 : index
    %c0_3 = arith.constant 0 : index
    %5 = vector.load %arg2[%c0_2, %c0_3] : memref<128x128xbf16, #tpu.memory_space<vmem>>, vector<128x128xbf16>
    %cst = arith.constant dense<0.000000e+00> : vector<32x128xf32>
    %6 = tpu.matmul %4, %5, %cst {dimension_numbers = #tpu.dot_dimension_numbers<[1], [0], [0], [1], [0, 0, 1, 1], [], []>} : vector<32x128xbf16>, vector<128x128xbf16>, vector<32x128xf32> -> vector<32x128xf32>
    %7 = arith.truncf %6 : vector<32x128xf32> to vector<32x128xbf16>
    %8 = tpu.concatenate %3, %7 in 1 : vector<32x128xbf16>, vector<32x128xbf16> -> vector<32x256xbf16>
    %c0_4 = arith.constant 0 : index
    %c0_5 = arith.constant 0 : index
    %9 = vector.load %arg3[%c0_4, %c0_5] : memref<256x128xbf16, #tpu.memory_space<vmem>>, vector<256x128xbf16>
    %cst_6 = arith.constant dense<0.000000e+00> : vector<32x128xf32>
    %10 = tpu.matmul %8, %9, %cst_6 {dimension_numbers = #tpu.dot_dimension_numbers<[1], [0], [0], [1], [0, 0, 1, 1], [], []>} : vector<32x256xbf16>, vector<256x128xbf16>, vector<32x128xf32> -> vector<32x128xf32>
    %c0_7 = arith.constant 0 : index
    %c0_8 = arith.constant 0 : index
    %11 = vector.load %arg4[%c0_7, %c0_8] : memref<1x128xf32, #tpu.memory_space<vmem>>, vector<1x128xf32>
    %12 = vector.broadcast %11 : vector<1x128xf32> to vector<32x128xf32>
    %13 = arith.addf %10, %12 : vector<32x128xf32>
    %cst_9 = arith.constant 0.000000e+00 : f32
    %14 = vector.broadcast %cst_9 : f32 to vector<32x128xf32>
    %15 = arith.maximumf %13, %14 : vector<32x128xf32>
    %c0_10 = arith.constant 0 : index
    %c0_11 = arith.constant 0 : index
    %16 = vector.load %arg5[%c0_10, %c0_11] : memref<32x128xbf16, #tpu.memory_space<vmem>>, vector<32x128xbf16>
    %17 = arith.extf %16 : vector<32x128xbf16> to vector<32x128xf32>
    %18 = arith.mulf %15, %17 : vector<32x128xf32>
    %19 = arith.truncf %18 : vector<32x128xf32> to vector<32x128xbf16>
    %c0_12 = arith.constant 0 : index
    %c0_13 = arith.constant 0 : index
    %20 = vector.load %arg6[%c0_12, %c0_13] : memref<32x128xbf16, #tpu.memory_space<vmem>>, vector<32x128xbf16>
    tpu.vector_store %arg6[%c0_12, %c0_13], %19 {strides = array<i32>} : memref<32x128xbf16, #tpu.memory_space<vmem>>, vector<32x128xbf16>,
    return
  }
  func.func @transform_0(%arg0: i32) -> (i32, i32) {
    %c0_i32 = arith.constant 0 : i32
    %c0_i32_0 = arith.constant 0 : i32
    return %arg0, %c0_i32 : i32, i32
  }
  func.func @transform_1(%arg0: i32) -> (i32, i32) {
    %c0_i32 = arith.constant 0 : i32
    %c0_i32_0 = arith.constant 0 : i32
    %c0_i32_1 = arith.constant 0 : i32
    return %c0_i32, %c0_i32_0 : i32, i32
  }
  func.func @transform_2(%arg0: i32) -> (i32, i32) {
    %c0_i32 = arith.constant 0 : i32
    %c0_i32_0 = arith.constant 0 : i32
    %c0_i32_1 = arith.constant 0 : i32
    return %c0_i32, %c0_i32_0 : i32, i32
  }
  func.func @transform_3(%arg0: i32) -> (i32, i32) {
    %c0_i32 = arith.constant 0 : i32
    %c0_i32_0 = arith.constant 0 : i32
    %c0_i32_1 = arith.constant 0 : i32
    return %c0_i32, %c0_i32_0 : i32, i32
  }
  func.func @transform_4(%arg0: i32) -> (i32, i32) {
    %c0_i32 = arith.constant 0 : i32
    %c0_i32_0 = arith.constant 0 : i32
    return %arg0, %c0_i32 : i32, i32
  }
  func.func @transform_5(%arg0: i32) -> (i32, i32) {
    %c0_i32 = arith.constant 0 : i32
    %c0_i32_0 = arith.constant 0 : i32
    return %arg0, %c0_i32 : i32, i32
  }
}

</mosaic_0001>

<llo_original>
// kernel: tpu_custom_call.1
$region0: #{tpu_custom_call.1}
  #allocation0 [shape = 'u32[]', space=smem, size = 0x4, offset = 0x4, fixed_abs, tag = 'smem constant byte address 0x4 - core index']
  #allocation1 [shape = 'u32[144,128]{1,0:T(1,128)}', space=vmem, size = 0x12000, scoped, tag = 'internal scratch']
  %s0 = inlined_call_operand.hbm [shape: bf16[32,128], index: 0, kind: input, shape index: {}]
  %s1 = inlined_call_operand.hbm [shape: bf16[128,128], index: 1, kind: input, shape index: {}]
  %s2 = inlined_call_operand.hbm [shape: bf16[256,128], index: 2, kind: input, shape index: {}]
  %s3 = inlined_call_operand.hbm [shape: f32[1,128], index: 3, kind: input, shape index: {}]
  %s4 = inlined_call_operand.hbm [shape: bf16[32,128], index: 4, kind: input, shape index: {}]
  %s5 = inlined_call_operand.hbm [shape: bf16[32,128], index: 5, kind: output, shape index: {}]
  %s6 = sld [smem:[#allocation0]]
  $region50: #{tpu_custom_call.1} parent=0
    _
  %s8 = ssub.s32 1, %s6
  %s9 = scalar_select 0, %s8, %s6
  $region1: #{tpu_custom_call.1} parent=0
    #allocation2 [shape = 'u8[8192]{0}', space=vmem, size = 0x2000, scoped, tag = 'input window, operand 0, single buffered']
    #allocation3 [shape = 's32[1]{0}', space=sflag, size = 0x4, scoped, tag = 'scoped memory for tpu_custom_call.1']
    #allocation4 [shape = 's32[1]{0}', space=sflag, size = 0x4, scoped, tag = 'scoped memory for tpu_custom_call.1']
    #allocation5 [shape = 'u8[32768]{0}', space=vmem, size = 0x8000, scoped, tag = 'input window, operand 1, single buffered']
    #allocation6 [shape = 's32[1]{0}', space=sflag, size = 0x4, scoped, tag = 'scoped memory for tpu_custom_call.1']
    #allocation7 [shape = 'u8[65536]{0}', space=vmem, size = 0x10000, scoped, tag = 'input window, operand 2, single buffered']
    #allocation8 [shape = 'u8[512]{0}', space=vmem, size = 0x400, scoped, tag = 'input window, operand 3, single buffered']
    #allocation9 [shape = 's32[1]{0}', space=sflag, size = 0x4, scoped, tag = 'scoped memory for tpu_custom_call.1']
    #allocation10 [shape = 'u8[8192]{0}', space=vmem, size = 0x2000, scoped, tag = 'input window, operand 4, single buffered']
    #allocation11 [shape = 'u8[8192]{0}', space=vmem, size = 0x2000, scoped, tag = 'output window, operand 0, single buffered']
    %10 = vsyncpa [#allocation3], 0
    %11 = vsyncpa [#allocation6], 0
    %12 = vsyncpa [#allocation9], 0
    %13 = vsyncpa [#allocation4], 0
    // Predicated region
    $region2: #{tpu_custom_call.1} parent=1 // pred_check
      _
    $region3: #{tpu_custom_call.1} parent=1 // pred_check_branch
      %15 = sbr.rel (0) target = $region5
    $region4: #{tpu_custom_call.1} parent=1 // pred_region
      %s17 = ssub.s32 256, 256
      %18 = vsyncadd [#allocation3], %s17
      %s19 = sshll.u32 [#allocation2], 4
      %s20 = int_to_ptr.vmem [resolvable:$true] %s19
      %25 = dma.hbm_to_vmem [thread:$0]  %s0, 256, %s20, [#allocation3], 64, 64, 4
    $region5: #{tpu_custom_call.1} parent=1 // pred_fallthru
      _
    // Predicated region
    $region6: #{tpu_custom_call.1} parent=1 // pred_check
      _
    $region7: #{tpu_custom_call.1} parent=1 // pred_check_branch
      %27 = sbr.rel (0) target = $region9
    $region8: #{tpu_custom_call.1} parent=1 // pred_region
      %s29 = ssub.s32 1024, 1024
      %30 = vsyncadd [#allocation6], %s29
      %s31 = sshll.u32 [#allocation5], 4
      %s32 = int_to_ptr.vmem [resolvable:$true] %s31
      %37 = dma.hbm_to_vmem [thread:$0]  %s1, 1024, %s32, [#allocation6], 64, 64, 4
    $region9: #{tpu_custom_call.1} parent=1 // pred_fallthru
      _
    // Predicated region
    $region10: #{tpu_custom_call.1} parent=1 // pred_check
      _
    $region11: #{tpu_custom_call.1} parent=1 // pred_check_branch
      %39 = sbr.rel (0) target = $region13
    $region12: #{tpu_custom_call.1} parent=1 // pred_region
      %s41 = ssub.s32 2048, 2048
      %42 = vsyncadd [#allocation6], %s41
      %s43 = sshll.u32 [#allocation7], 4
      %s44 = int_to_ptr.vmem [resolvable:$true] %s43
      %49 = dma.hbm_to_vmem [thread:$0]  %s2, 2048, %s44, [#allocation6], 64, 64, 4
    $region13: #{tpu_custom_call.1} parent=1 // pred_fallthru
      _
    // Predicated region
    $region14: #{tpu_custom_call.1} parent=1 // pred_check
      _
    $region15: #{tpu_custom_call.1} parent=1 // pred_check_branch
      %51 = sbr.rel (0) target = $region17
    $region16: #{tpu_custom_call.1} parent=1 // pred_region
      %s53 = ssub.s32 16, 16
      %54 = vsyncadd [#allocation9], %s53
      %s56 = sshll.u32 [#allocation8], 4
      %s57 = int_to_ptr.vmem [resolvable:$true] %s56
      %59 = dma.hbm_to_vmem [thread:$0]  %s3, 16, %s57, [#allocation9]
    $region17: #{tpu_custom_call.1} parent=1 // pred_fallthru
      _
    // Predicated region
    $region18: #{tpu_custom_call.1} parent=1 // pred_check
      _
    $region19: #{tpu_custom_call.1} parent=1 // pred_check_branch
      %61 = sbr.rel (0) target = $region21
    $region20: #{tpu_custom_call.1} parent=1 // pred_region
      %s63 = ssub.s32 256, 256
      %64 = vsyncadd [#allocation9], %s63
      %s65 = sshll.u32 [#allocation10], 4
      %s66 = int_to_ptr.vmem [resolvable:$true] %s65
      %71 = dma.hbm_to_vmem [thread:$0]  %s4, 256, %s66, [#allocation9], 64, 64, 4
    $region21: #{tpu_custom_call.1} parent=1 // pred_fallthru
      _
    // Predicated region
    $region22: #{tpu_custom_call.1} parent=1 // pred_check
      _
    $region23: #{tpu_custom_call.1} parent=1 // pred_check_branch
      %73 = sbr.rel (0) target = $region25
    $region24: #{tpu_custom_call.1} parent=1 // pred_region
      %74 = dma.done [#allocation3], 256
    $region25: #{tpu_custom_call.1} parent=1 // pred_fallthru
      _
    // Predicated region
    $region26: #{tpu_custom_call.1} parent=1 // pred_check
      _
    $region27: #{tpu_custom_call.1} parent=1 // pred_check_branch
      %76 = sbr.rel (0) target = $region29
    $region28: #{tpu_custom_call.1} parent=1 // pred_region
      %77 = dma.done [#allocation6], 1024
    $region29: #{tpu_custom_call.1} parent=1 // pred_fallthru
      _
    // Predicated region
    $region30: #{tpu_custom_call.1} parent=1 // pred_check
      _
    $region31: #{tpu_custom_call.1} parent=1 // pred_check_branch
      %79 = sbr.rel (0) target = $region33
    $region32: #{tpu_custom_call.1} parent=1 // pred_region
      %80 = dma.done [#allocation6], 2048
    $region33: #{tpu_custom_call.1} parent=1 // pred_fallthru
      _
    // Predicated region
    $region34: #{tpu_custom_call.1} parent=1 // pred_check
      _
    $region35: #{tpu_custom_call.1} parent=1 // pred_check_branch
      %82 = sbr.rel (0) target = $region37
    $region36: #{tpu_custom_call.1} parent=1 // pred_region
      %83 = dma.done [#allocation9], 16
    $region37: #{tpu_custom_call.1} parent=1 // pred_fallthru
      _
    // Predicated region
    $region38: #{tpu_custom_call.1} parent=1 // pred_check
      _
    $region39: #{tpu_custom_call.1} parent=1 // pred_check_branch
      %85 = sbr.rel (0) target = $region41
    $region40: #{tpu_custom_call.1} parent=1 // pred_region
      %86 = dma.done [#allocation9], 256
    $region41: #{tpu_custom_call.1} parent=1 // pred_fallthru
      _
    %s88 = smul.u32 0, 32
    %s89 = sshra.s32 %s88, 3
    %s90 = sand.u32 %s88, 7
    %s91 = smul.addr %s89, 4
    %s92 = scalar_lea.vmem [#allocation5], %s91
    %v93 = vld [vmem:[%s92] sm:$0xf]
    %v94 = vld [vmem:[%s92 + $0x4] sm:$0xf]
    %v95 = vld [vmem:[%s92 + $0x8] sm:$0xf]
    %v96 = vld [vmem:[%s92 + $0xc] sm:$0xf]
    %v97 = vld [vmem:[#allocation2] sm:$0xf]
    %v98 = vld [vmem:[#allocation2 + $0x4] sm:$0xf]
    %v99 = vld [vmem:[#allocation2 + $0x8] sm:$0xf]
    %v100 = vld [vmem:[#allocation2 + $0xc] sm:$0xf]
    %v101 = vld [vmem:[#allocation5] sm:$0xf]
    %v102 = vld [vmem:[#allocation5 + $0x4] sm:$0xf]
    %v103 = vld [vmem:[#allocation5 + $0x8] sm:$0xf]
    %v104 = vld [vmem:[#allocation5 + $0xc] sm:$0xf]
    %v105 = vld [vmem:[#allocation5 + $0x10] sm:$0xf]
    %v106 = vld [vmem:[#allocation5 + $0x14] sm:$0xf]
    %v107 = vld [vmem:[#allocation5 + $0x18] sm:$0xf]
    %v108 = vld [vmem:[#allocation5 + $0x1c] sm:$0xf]
    %v109 = vld [vmem:[#allocation5 + $0x20] sm:$0xf]
    %v110 = vld [vmem:[#allocation5 + $0x24] sm:$0xf]
    %v111 = vld [vmem:[#allocation5 + $0x28] sm:$0xf]
    %v112 = vld [vmem:[#allocation5 + $0x2c] sm:$0xf]
    %v113 = vld [vmem:[#allocation5 + $0x30] sm:$0xf]
    %v114 = vld [vmem:[#allocation5 + $0x34] sm:$0xf]
    %v115 = vld [vmem:[#allocation5 + $0x38] sm:$0xf]
    %v116 = vld [vmem:[#allocation5 + $0x3c] sm:$0xf]
    %v121 = vunpack.c.l.b16 %v97
    %v122 = vunpack.c.l.b16 %v98
    %v123 = vunpack.c.l.b16 %v99
    %v124 = vunpack.c.l.b16 %v100
    %v125 = vpack.c.b16 %v122, %v121
    %v126 = vpack.c.b16 %v124, %v123
    %v145 = vunpack.c.l.b16 %v101
    %v146 = vunpack.c.l.b16 %v102
    %v147 = vunpack.c.l.b16 %v103
    %v148 = vunpack.c.l.b16 %v104
    %v149 = vunpack.c.l.b16 %v105
    %v150 = vunpack.c.l.b16 %v106
    %v151 = vunpack.c.l.b16 %v107
    %v152 = vunpack.c.l.b16 %v108
    %v153 = vunpack.c.l.b16 %v109
    %v154 = vunpack.c.l.b16 %v110
    %v155 = vunpack.c.l.b16 %v111
    %v156 = vunpack.c.l.b16 %v112
    %v157 = vunpack.c.l.b16 %v113
    %v158 = vunpack.c.l.b16 %v114
    %v159 = vunpack.c.l.b16 %v115
    %v160 = vunpack.c.l.b16 %v116
    %v161 = vpack.c.b16 %v146, %v145
    %v162 = vpack.c.b16 %v148, %v147
    %v163 = vpack.c.b16 %v150, %v149
    %v164 = vpack.c.b16 %v152, %v151
    %v165 = vpack.c.b16 %v154, %v153
    %v166 = vpack.c.b16 %v156, %v155
    %v167 = vpack.c.b16 %v158, %v157
    %v168 = vpack.c.b16 %v160, %v159
    %177 = vmatprep.subr.bf16.mxu0 0
    %178 = vmatpush1.bf16.msra.mxu0 %v161
    %179 = vmatprep.subr.bf16.mxu0 0
    %180 = vmatpush1.bf16.msra.mxu0 %v162
    %181 = vmatprep.subr.bf16.mxu0 0
    %182 = vmatpush1.bf16.msra.mxu0 %v163
    %183 = vmatprep.subr.bf16.mxu0 0
    %184 = vmatpush1.bf16.msra.mxu0 %v164
    %185 = vmatprep.subr.bf16.mxu0 0
    %186 = vmatpush1.bf16.msra.mxu0 %v165
    %187 = vmatprep.subr.bf16.mxu0 0
    %188 = vmatpush1.bf16.msra.mxu0 %v166
    %189 = vmatprep.subr.bf16.mxu0 0
    %190 = vmatpush1.bf16.msra.mxu0 %v167
    %191 = vmatprep.subr.bf16.mxu0 0
    %192 = vmatpush1.bf16.msra.mxu0 %v168
    %193 = vmatprep.subr.bf16.mxu0 0
    %194 = vmatpush1.bf16.msra.mxu0 0
    %195 = vmatprep.subr.bf16.mxu0 0
    %196 = vmatpush1.bf16.msra.mxu0 0
    %197 = vmatprep.subr.bf16.mxu0 0
    %198 = vmatpush1.bf16.msra.mxu0 0
    %199 = vmatprep.subr.bf16.mxu0 0
    %200 = vmatpush1.bf16.msra.mxu0 0
    %201 = vmatprep.subr.bf16.mxu0 0
    %202 = vmatpush1.bf16.msra.mxu0 0
    %203 = vmatprep.subr.bf16.mxu0 0
    %204 = vmatpush1.bf16.msra.mxu0 0
    %205 = vmatprep.subr.bf16.mxu0 0
    %206 = vmatpush1.bf16.msra.mxu0 0
    %207 = vmatprep.subr.bf16.mxu0 0
    %208 = vmatpush1.bf16.msra.mxu0 0
    %209 = vmatprep.mubr.bf16.mxu0 0
    %210 = vmatmul.mubr.bf16.gmra.mrb[0].mxu0 %v125
    %v211 = vpop.f32.mrb[0].mxu0
    %v212 = vadd.f32 0.0, %v211
    %v213 = vpop.f32.mrb[0].mxu0
    %v214 = vpop.f32.mrb[0].mxu0
    %v215 = vadd.f32 0.0, %v214
    %v216 = vpop.f32.mrb[0].mxu0
    %217 = vmatprep.mubr.bf16.mxu0 0
    %218 = vmatmul.mubr.bf16.gmra.mrb[0].mxu0 %v126
    %v219 = vpop.f32.mrb[0].mxu0
    %v220 = vadd.f32 0.0, %v219
    %v221 = vpop.f32.mrb[0].mxu0
    %v222 = vpop.f32.mrb[0].mxu0
    %v223 = vadd.f32 0.0, %v222
    %v224 = vpop.f32.mrb[0].mxu0
    %225 = vdwg.mxu0
    %v226 = vpack.c.bf16 %v215, %v212
    %v227 = vpack.c.bf16 %v223, %v220
    %v232 = vunpack.c.l.b16 %v93
    %v233 = vunpack.c.l.b16 %v94
    %v234 = vunpack.c.l.b16 %v95
    %v235 = vunpack.c.l.b16 %v96
    %v236 = vpack.c.b16 %v233, %v232
    %v237 = vpack.c.b16 %v235, %v234
    %v240 = vld [vmem:[#allocation7] sm:$0xf]
    %v241 = vld [vmem:[#allocation7 + $0x4] sm:$0xf]
    %v242 = vld [vmem:[#allocation7 + $0x8] sm:$0xf]
    %v243 = vld [vmem:[#allocation7 + $0xc] sm:$0xf]
    %v244 = vld [vmem:[#allocation7 + $0x10] sm:$0xf]
    %v245 = vld [vmem:[#allocation7 + $0x14] sm:$0xf]
    %v246 = vld [vmem:[#allocation7 + $0x18] sm:$0xf]
    %v247 = vld [vmem:[#allocation7 + $0x1c] sm:$0xf]
    %v248 = vld [vmem:[#allocation7 + $0x20] sm:$0xf]
    %v249 = vld [vmem:[#allocation7 + $0x24] sm:$0xf]
    %v250 = vld [vmem:[#allocation7 + $0x28] sm:$0xf]
    %v251 = vld [vmem:[#allocation7 + $0x2c] sm:$0xf]
    %v252 = vld [vmem:[#allocation7 + $0x30] sm:$0xf]
    %v253 = vld [vmem:[#allocation7 + $0x34] sm:$0xf]
    %v254 = vld [vmem:[#allocation7 + $0x38] sm:$0xf]
    %v255 = vld [vmem:[#allocation7 + $0x3c] sm:$0xf]
    %v256 = vld [vmem:[#allocation7 + $0x40] sm:$0xf]
    %v257 = vld [vmem:[#allocation7 + $0x44] sm:$0xf]
    %v258 = vld [vmem:[#allocation7 + $0x48] sm:$0xf]
    %v259 = vld [vmem:[#allocation7 + $0x4c] sm:$0xf]
    %v260 = vld [vmem:[#allocation7 + $0x50] sm:$0xf]
    %v261 = vld [vmem:[#allocation7 + $0x54] sm:$0xf]
    %v262 = vld [vmem:[#allocation7 + $0x58] sm:$0xf]
    %v263 = vld [vmem:[#allocation7 + $0x5c] sm:$0xf]
    %v264 = vld [vmem:[#allocation7 + $0x60] sm:$0xf]
    %v265 = vld [vmem:[#allocation7 + $0x64] sm:$0xf]
    %v266 = vld [vmem:[#allocation7 + $0x68] sm:$0xf]
    %v267 = vld [vmem:[#allocation7 + $0x6c] sm:$0xf]
    %v268 = vld [vmem:[#allocation7 + $0x70] sm:$0xf]
    %v269 = vld [vmem:[#allocation7 + $0x74] sm:$0xf]
    %v270 = vld [vmem:[#allocation7 + $0x78] sm:$0xf]
    %v271 = vld [vmem:[#allocation7 + $0x7c] sm:$0xf]
    %v272 = vld [vmem:[#allocation8] sm:$0x1]
    %v274 = vlaneseq
    %v275 = vshrl.u32 %v274, 7
    %v276 = vsub.s32 0, %v275
    %v277 = vrot.slane %v272, %v276
    %v311 = vunpack.c.l.b16 %v240
    %v312 = vunpack.c.l.b16 %v241
    %v313 = vunpack.c.l.b16 %v242
    %v314 = vunpack.c.l.b16 %v243
    %v315 = vunpack.c.l.b16 %v244
    %v316 = vunpack.c.l.b16 %v245
    %v317 = vunpack.c.l.b16 %v246
    %v318 = vunpack.c.l.b16 %v247
    %v319 = vunpack.c.l.b16 %v248
    %v320 = vunpack.c.l.b16 %v249
    %v321 = vunpack.c.l.b16 %v250
    %v322 = vunpack.c.l.b16 %v251
    %v323 = vunpack.c.l.b16 %v252
    %v324 = vunpack.c.l.b16 %v253
    %v325 = vunpack.c.l.b16 %v254
    %v326 = vunpack.c.l.b16 %v255
    %v327 = vunpack.c.l.b16 %v256
    %v328 = vunpack.c.l.b16 %v257
    %v329 = vunpack.c.l.b16 %v258
    %v330 = vunpack.c.l.b16 %v259
    %v331 = vunpack.c.l.b16 %v260
    %v332 = vunpack.c.l.b16 %v261
    %v333 = vunpack.c.l.b16 %v262
    %v334 = vunpack.c.l.b16 %v263
    %v335 = vunpack.c.l.b16 %v264
    %v336 = vunpack.c.l.b16 %v265
    %v337 = vunpack.c.l.b16 %v266
    %v338 = vunpack.c.l.b16 %v267
    %v339 = vunpack.c.l.b16 %v268
    %v340 = vunpack.c.l.b16 %v269
    %v341 = vunpack.c.l.b16 %v270
    %v342 = vunpack.c.l.b16 %v271
    %v343 = vpack.c.b16 %v312, %v311
    %v344 = vpack.c.b16 %v314, %v313
    %v345 = vpack.c.b16 %v316, %v315
    %v346 = vpack.c.b16 %v318, %v317
    %v347 = vpack.c.b16 %v320, %v319
    %v348 = vpack.c.b16 %v322, %v321
    %v349 = vpack.c.b16 %v324, %v323
    %v350 = vpack.c.b16 %v326, %v325
    %v351 = vpack.c.b16 %v328, %v327
    %v352 = vpack.c.b16 %v330, %v329
    %v353 = vpack.c.b16 %v332, %v331
    %v354 = vpack.c.b16 %v334, %v333
    %v355 = vpack.c.b16 %v336, %v335
    %v356 = vpack.c.b16 %v338, %v337
    %v357 = vpack.c.b16 %v340, %v339
    %v358 = vpack.c.b16 %v342, %v341
    %375 = vmatprep.subr.bf16.mxu0 0
    %376 = vmatpush1.bf16.msra.mxu0 %v343
    %377 = vmatprep.subr.bf16.mxu0 0
    %378 = vmatpush1.bf16.msra.mxu0 %v344
    %379 = vmatprep.subr.bf16.mxu0 0
    %380 = vmatpush1.bf16.msra.mxu0 %v345
    %381 = vmatprep.subr.bf16.mxu0 0
    %382 = vmatpush1.bf16.msra.mxu0 %v346
    %383 = vmatprep.subr.bf16.mxu0 0
    %384 = vmatpush1.bf16.msra.mxu0 %v347
    %385 = vmatprep.subr.bf16.mxu0 0
    %386 = vmatpush1.bf16.msra.mxu0 %v348
    %387 = vmatprep.subr.bf16.mxu0 0
    %388 = vmatpush1.bf16.msra.mxu0 %v349
    %389 = vmatprep.subr.bf16.mxu0 0
    %390 = vmatpush1.bf16.msra.mxu0 %v350
    %391 = vmatprep.subr.bf16.mxu0 0
    %392 = vmatpush1.bf16.msra.mxu0 %v351
    %393 = vmatprep.subr.bf16.mxu0 0
    %394 = vmatpush1.bf16.msra.mxu0 %v352
    %395 = vmatprep.subr.bf16.mxu0 0
    %396 = vmatpush1.bf16.msra.mxu0 %v353
    %397 = vmatprep.subr.bf16.mxu0 0
    %398 = vmatpush1.bf16.msra.mxu0 %v354
    %399 = vmatprep.subr.bf16.mxu0 0
    %400 = vmatpush1.bf16.msra.mxu0 %v355
    %401 = vmatprep.subr.bf16.mxu0 0
    %402 = vmatpush1.bf16.msra.mxu0 %v356
    %403 = vmatprep.subr.bf16.mxu0 0
    %404 = vmatpush1.bf16.msra.mxu0 %v357
    %405 = vmatprep.subr.bf16.mxu0 0
    %406 = vmatpush1.bf16.msra.mxu0 %v358
    %407 = vmatprep.mubr.bf16.mxu0 %v226
    %408 = vmatmul.mubr.bf16.gmra.mrb[0].mxu0 %v236
    %v409 = vpop.f32.mrb[0].mxu0
    %v410 = vadd.f32 %v277, %v409
    %v411 = vpop.f32.mrb[0].mxu0
    %v412 = vpop.f32.mrb[0].mxu0
    %v413 = vadd.f32 %v277, %v412
    %v414 = vpop.f32.mrb[0].mxu0
    %415 = vmatprep.mubr.bf16.mxu0 %v227
    %416 = vmatmul.mubr.bf16.gmra.mrb[0].mxu0 %v237
    %v417 = vpop.f32.mrb[0].mxu0
    %v418 = vadd.f32 %v277, %v417
    %v419 = vpop.f32.mrb[0].mxu0
    %v420 = vpop.f32.mrb[0].mxu0
    %v421 = vadd.f32 %v277, %v420
    %v422 = vpop.f32.mrb[0].mxu0
    %423 = vdwg.mxu0
    %v424 = vmax.f32 %v410, 0.0
    %v425 = vmax.f32 %v413, 0.0
    %v426 = vmax.f32 %v418, 0.0
    %v427 = vmax.f32 %v421, 0.0
    %v428 = vld [vmem:[#allocation10] sm:$0xf]
    %v429 = vld [vmem:[#allocation10 + $0x4] sm:$0xf]
    %v430 = vld [vmem:[#allocation10 + $0x8] sm:$0xf]
    %v431 = vld [vmem:[#allocation10 + $0xc] sm:$0xf]
    %v432 = vunpack.c.l.bf16 %v428
    %v433 = vunpack.c.l.bf16 %v429
    %v434 = vunpack.c.l.bf16 %v430
    %v435 = vunpack.c.l.bf16 %v431
    %v436 = vmul.f32 %v424, %v432
    %v437 = vmul.f32 %v425, %v433
    %v438 = vmul.f32 %v426, %v434
    %v439 = vmul.f32 %v427, %v435
    %v440 = vpack.c.bf16 %v437, %v436
    %v441 = vpack.c.bf16 %v439, %v438
    %v444 = vunpack.c.l.b16 %v440
    %v445 = vunpack.c.h.b16 %v440
    %v446 = vunpack.c.l.b16 %v441
    %v447 = vunpack.c.h.b16 %v441
    %v448 = vpack.c.b16 %v444, %v444
    %v449 = vpack.c.b16 %v445, %v445
    %v450 = vpack.c.b16 %v446, %v446
    %v451 = vpack.c.b16 %v447, %v447
    %456 = vst [vmem:[#allocation11] sm:$0xf] %v448
    %457 = vst [vmem:[#allocation11 + $0x4] sm:$0xf] %v449
    %458 = vst [vmem:[#allocation11 + $0x8] sm:$0xf] %v450
    %459 = vst [vmem:[#allocation11 + $0xc] sm:$0xf] %v451
    // Predicated region
    $region42: #{tpu_custom_call.1} parent=1 // pred_check
      _
    $region43: #{tpu_custom_call.1} parent=1 // pred_check_branch
      %461 = sbr.rel (0) target = $region45
    $region44: #{tpu_custom_call.1} parent=1 // pred_region
      %s463 = ssub.s32 256, 256
      %464 = vsyncadd [#allocation4], %s463
      %s465 = sshll.u32 [#allocation11], 4
      %s466 = int_to_ptr.vmem [resolvable:$true] %s465
      %471 = dma.vmem_to_hbm [thread:$0]  %s466, 256, %s5, [#allocation4], 64, 64, 4
    $region45: #{tpu_custom_call.1} parent=1 // pred_fallthru
      _
    // Predicated region
    $region46: #{tpu_custom_call.1} parent=1 // pred_check
      _
    $region47: #{tpu_custom_call.1} parent=1 // pred_check_branch
      %473 = sbr.rel (0) target = $region49
    $region48: #{tpu_custom_call.1} parent=1 // pred_region
      %474 = dma.done [#allocation4], 256
    $region49: #{tpu_custom_call.1} parent=1 // pred_fallthru
      _
    %475 = vsyncpa [#allocation3], 1
    %476 = vsyncpa [#allocation6], 1
    %477 = vsyncpa [#allocation9], 1
    %478 = vsyncpa [#allocation4], 1

</llo_original>
